<compile_context>
chip_gen: v7x
topology: tpu7x:2x2x1
jax: 0.10.0
libtpu: 0.0.40
codegen_flags: <defaults>
</compile_context>

<pallas_src>
from functools import partial

import jax
import jax.numpy as jnp
from jax.experimental import pallas as pl
from jax.experimental.pallas import tpu as pltpu


# ----------------------------------------------------------------------------
# Kernel
# ----------------------------------------------------------------------------
def _residual_block_kernel(x_ref, w_ref, b1_ref, bsc_ref, o_ref, *, OC):
    """One fused matmul + bias/ReLU epilogue per row tile.

    x_ref   : (tile_rows, 3*L)   bf16  - three kh slabs concatenated on lanes
    w_ref   : (3*L, 2*OC)        bf16  - [conv Toeplitz | shortcut Toeplitz]
    b1_ref  : (1, OC)            f32   - folded BN1 bias (tiled over W)
    bsc_ref : (1, OC)            f32   - folded shortcut BN bias
    o_ref   : (tile_rows, OC)    f32   - lane-dense output slab
    """
    y = jnp.dot(x_ref[...], w_ref[...], preferred_element_type=jnp.float32)
    main = jnp.maximum(y[:, :OC] + b1_ref[...], 0.0)          # layer1: BN bias + ReLU
    o_ref[...] = jnp.maximum(main + y[:, OC:] + bsc_ref[...], 0.0)  # +shortcut, ReLU


# ----------------------------------------------------------------------------
# Sizing helpers
# ----------------------------------------------------------------------------
def _vmem_limit_bytes():
    """Generation-aware VMEM cap: headroom on 64-MiB v7x, bigger on v5e/v6e."""
    phys = 64 << 20
    try:
        phys = int(pltpu.get_tpu_info().vmem_capacity_bytes)
    except Exception:
        pass
    if phys <= (64 << 20):          # v7x-class: 64 MiB per TensorCore
        return 52 << 20
    return 100 << 20                # v5e / v6e: 128 MiB physical


def _pick_tile_rows(total_rows, bytes_per_row, vmem_budget,
                    min_steps=4, target_rows=4096):
    """Rows of the (N*H, 3L) slab handled per grid step.

    Sized from the VMEM budget (big tiles amortize the ~0.35us/step overhead),
    but clamped so the grid keeps >= min_steps steps (>= 2 per TensorCore on
    dual-TC v7x) when the problem is large enough; snapped to a divisor of
    total_rows that is a multiple of 16 (bf16 sublane packing) when possible.
    """
    cap = max(8, int(vmem_budget) // max(int(bytes_per_row), 1))
    t = min(total_rows, target_rows, cap)
    if total_rows >= min_steps * 8:
        t = min(t, max(8, total_rows // min_steps))
    t = max(8, min(t, total_rows))
    cand = (t // 16) * 16
    while cand >= 16 and total_rows % cand:
        cand -= 16
    if cand >= 16:
        return cand
    while total_rows % t:
        t -= 1
    return max(t, 1)


# ----------------------------------------------------------------------------
# One-time weight preparation (hoisted out of the per-call forward)
# ----------------------------------------------------------------------------
def prepare_residual_block(p, W, eps=1e-5):
    """Fold BN into the convs and build the fused block-Toeplitz weight once."""
    Cout, Cin = p["w1"].shape[:2]
    L = (W + 2) * Cin
    OC = W * Cout

    s1 = p["g1"] / jnp.sqrt(p["v1"] + eps)
    bias1 = (p["b1"] - p["m1"]) * s1 + p["be1"]
    ssc = p["gsc"] / jnp.sqrt(p["vsc"] + eps)
    biassc = (p["bsc"] - p["msc"]) * ssc + p["besc"]

    w1s = jnp.transpose(p["w1"], (2, 3, 1, 0)) * s1               # (3,3,Cin,Cout)
    wscs = jnp.transpose(p["wsc"][:, :, 0, 0], (1, 0)) * ssc      # (Cin,Cout)

    # Block-Toeplitz embedding over W: kw shifts become bands of the weights.
    #   Wt[kh][(w+kw)*Cin+ci, w*Cout+co] = w1s[kh, kw, ci, co]
    E = jnp.stack([jnp.eye(W + 2, W, k=-kw, dtype=jnp.float32)
                   for kw in range(3)])                           # (3, W+2, W)
    wt = jnp.einsum("kpw,hkic->hpiwc", E, w1s).reshape(3, L, OC)
    wsct = jnp.einsum("pw,ic->piwc", E[1], wscs).reshape(L, OC)

    # Fused weight: columns [:OC] = 3x3 conv, [OC:] = 1x1 shortcut (kh=1 only).
    zeros = jnp.zeros((L, OC), jnp.float32)
    w_all = jnp.concatenate([
        jnp.concatenate([wt[0], zeros], axis=1),
        jnp.concatenate([wt[1], wsct], axis=1),
        jnp.concatenate([wt[2], zeros], axis=1),
    ], axis=0).astype(jnp.bfloat16)                               # (3L, 2*OC)

    return {
        "w_all": w_all,
        "b1_lane": jnp.tile(bias1, W).reshape(1, OC).astype(jnp.float32),
        "bsc_lane": jnp.tile(biassc, W).reshape(1, OC).astype(jnp.float32),
    }


# ----------------------------------------------------------------------------
# Forward
# ----------------------------------------------------------------------------
def residual_block_forward(x_nchw, prep):
    """x_nchw: (N, Cin, H, W) float32. Returns (N, Cout, H, W) float32."""
    N, Cin, H, W = x_nchw.shape
    w_all, b1_lane, bsc_lane = prep["w_all"], prep["b1_lane"], prep["bsc_lane"]
    L = (W + 2) * Cin
    OC = b1_lane.shape[1]                     # W * Cout
    Cout = OC // W
    R = N * H                                 # total output rows

    # ---- layout glue: NCHW -> padded per-kh row slabs concatenated on lanes.
    # TODO(synk): a real pipeline should keep activations in this (R, 3L) row
    # slab layout end-to-end; these transpose/pad passes are extra HBM traffic
    # outside the kernel.
    x = jnp.transpose(x_nchw, (0, 2, 3, 1)).astype(jnp.float32)   # NHWC
    xpad = jnp.pad(x, ((0, 0), (1, 1), (1, 1), (0, 0)))           # (N,H+2,W+2,Cin)
    slabs = [xpad[:, kh:kh + H].reshape(N, H, L) for kh in range(3)]
    x_slab = jnp.concatenate(slabs, axis=-1).reshape(R, 3 * L).astype(jnp.bfloat16)

    # ---- tile sizing from a generation-aware VMEM budget.
    vmem_limit = _vmem_limit_bytes()
    w_bytes = 2 * (w_all.size * 2) + 2 * (b1_lane.size + bsc_lane.size) * 4
    bytes_per_row = 2 * (3 * L * 2) + 2 * (OC * 4) + (2 * OC * 4)
    budget = max(vmem_limit - w_bytes - (4 << 20), 1 << 20)
    tile_rows = _pick_tile_rows(R, bytes_per_row, budget)
    grid = (R // tile_rows,)

    kernel = partial(_residual_block_kernel, OC=OC)

    out_rows = pl.pallas_call(
        kernel,
        grid=grid,
        in_specs=[
            pl.BlockSpec((tile_rows, 3 * L), lambda i: (i, 0)),
            # weights/biases: grid-invariant index_map -> no re-DMA across steps
            pl.BlockSpec((3 * L, 2 * OC), lambda i: (0, 0)),
            pl.BlockSpec((1, OC), lambda i: (0, 0)),
            pl.BlockSpec((1, OC), lambda i: (0, 0)),
        ],
        out_specs=pl.BlockSpec((tile_rows, OC), lambda i: (i, 0)),
        out_shape=jax.ShapeDtypeStruct((R, OC), jnp.float32),
        compiler_params=pltpu.CompilerParams(
            dimension_semantics=("parallel",),
            vmem_limit_bytes=int(vmem_limit)),
    )(x_slab, w_all, b1_lane, bsc_lane)

    # (N*H, W*Cout) -> (N, H, W, Cout) -> NCHW (column layout is w*Cout + co).
    out = out_rows.reshape(N, H, W, Cout)
    return jnp.transpose(out, (0, 3, 1, 2))


# ----------------------------------------------------------------------------
# Pure-JAX reference (mirrors the PyTorch forward with eval-mode BN)
# ----------------------------------------------------------------------------
def _reference(x_nchw, p, eps=1e-5):
    dn = ("NCHW", "OIHW", "NCHW")

    def bn(y, g, b, m, v):
        s = (g / jnp.sqrt(v + eps))[None, :, None, None]
        return (y - m[None, :, None, None]) * s + b[None, :, None, None]

    y = jax.lax.conv_general_dilated(x_nchw, p["w1"], (1, 1),
                                     ((1, 1), (1, 1)), dimension_numbers=dn)
    y = y + p["b1"][None, :, None, None]
    y = jnp.maximum(bn(y, p["g1"], p["be1"], p["m1"], p["v1"]), 0.0)

    sc = jax.lax.conv_general_dilated(x_nchw, p["wsc"], (1, 1),
                                      ((0, 0), (0, 0)), dimension_numbers=dn)
    sc = sc + p["bsc"][None, :, None, None]
    sc = bn(sc, p["gsc"], p["besc"], p["msc"], p["vsc"])
    return jnp.maximum(y + sc, 0.0)


def _init_params(key, in_channels, out_channels):
    ks = jax.random.split(key, 6)
    return {
        # layer1: Conv2d(in, out, 3, stride=1, padding=1) + BatchNorm2d(out)
        "w1":  0.1 * jax.random.normal(ks[0], (out_channels, in_channels, 3, 3), jnp.float32),
        "b1":  0.1 * jax.random.normal(ks[1], (out_channels,), jnp.float32),
        "g1":  1.0 + 0.1 * jax.random.normal(ks[2], (out_channels,), jnp.float32),
        "be1": 0.1 * jax.random.normal(ks[3], (out_channels,), jnp.float32),
        "m1":  0.05 * jnp.arange(out_channels, dtype=jnp.float32),
        "v1":  1.0 + 0.01 * jnp.arange(out_channels, dtype=jnp.float32),
        # shortcut: Conv2d(in, out, 1, stride=1) + BatchNorm2d(out)
        "wsc":  0.1 * jax.random.normal(ks[4], (out_channels, in_channels, 1, 1), jnp.float32),
        "bsc":  0.1 * jax.random.normal(ks[5], (out_channels,), jnp.float32),
        "gsc":  jnp.ones((out_channels,), jnp.float32),
        "besc": jnp.zeros((out_channels,), jnp.float32),
        "msc":  jnp.full((out_channels,), 0.1, jnp.float32),
        "vsc":  jnp.full((out_channels,), 1.2, jnp.float32),
    }
    # TODO(synk): stride > 1 path (strided conv / strided shortcut) not
    # implemented; this exercises the stride=1, in_channels != out_channels
    # branch (the module's default arguments).


if __name__ == "__main__":
    key = jax.random.PRNGKey(0)
    k_x, k_p = jax.random.split(key)

    # Small shapes; batch=4 so the row grid has >= 4 steps (2 per TC on v7x).
    N, Cin, Cout, H, W = 4, 4, 8, 16, 16
    x = jax.random.normal(k_x, (N, Cin, H, W), jnp.float32)
    params = _init_params(k_p, Cin, Cout)

    # Hoisted, one-time BN fold + Toeplitz weight build.
    prep = prepare_residual_block(params, W)
    fwd = jax.jit(residual_block_forward)

    out = jax.block_until_ready(fwd(x, prep))
    ref = jax.block_until_ready(_reference(x, params))

    assert out.shape == (N, Cout, H, W)
    err = float(jnp.max(jnp.abs(out - ref)))
    # bf16 matmul operands with f32 accumulation -> loosened tolerance.
    assert jnp.allclose(out, ref, atol=2e-2, rtol=2e-2), err

    print("KERNEL_OK")
</pallas_src>

<mosaic_0001>
module attributes {stable_mosaic.version = 11 : i64} {
  func.func @_residual_block_kernel(%arg0: i32, %arg1: memref<16x216xbf16, #tpu.memory_space<vmem>>, %arg2: memref<216x256xbf16, #tpu.memory_space<vmem>>, %arg3: memref<1x128xf32, #tpu.memory_space<vmem>>, %arg4: memref<1x128xf32, #tpu.memory_space<vmem>>, %arg5: memref<16x128xf32, #tpu.memory_space<vmem>>) attributes {dimension_semantics = [#tpu.dimension_semantics<parallel>], iteration_bounds = array<i64: 4>, scalar_prefetch = 0 : i64, scratch_operands = 0 : i64, tpu.core_type = #tpu.core_type<tc>, window_params = [{transform_indices = @transform_0, window_bounds = array<i64: 16, 216>}, {pipeline_mode = #tpu.pipeline_mode<synchronous>, transform_indices = @transform_1, window_bounds = array<i64: 216, 256>}, {pipeline_mode = #tpu.pipeline_mode<synchronous>, transform_indices = @transform_2, window_bounds = array<i64: 1, 128>}, {pipeline_mode = #tpu.pipeline_mode<synchronous>, transform_indices = @transform_3, window_bounds = array<i64: 1, 128>}, {transform_indices = @transform_4, window_bounds = array<i64: 16, 128>}]} {
    %c0 = arith.constant 0 : index
    %c0_0 = arith.constant 0 : index
    %0 = vector.load %arg1[%c0, %c0_0] : memref<16x216xbf16, #tpu.memory_space<vmem>>, vector<16x216xbf16>
    %c0_1 = arith.constant 0 : index
    %c0_2 = arith.constant 0 : index
    %1 = vector.load %arg2[%c0_1, %c0_2] : memref<216x256xbf16, #tpu.memory_space<vmem>>, vector<216x256xbf16>
    %cst = arith.constant dense<0.000000e+00> : vector<16x256xf32>
    %2 = tpu.matmul %0, %1, %cst {dimension_numbers = #tpu.dot_dimension_numbers<[1], [0], [0], [1], [0, 0, 1, 1], [], []>} : vector<16x216xbf16>, vector<216x256xbf16>, vector<16x256xf32> -> vector<16x256xf32>
    %3 = vector.extract_strided_slice %2 {offsets = [0, 0], sizes = [16, 128], strides = [1, 1]} : vector<16x256xf32> to vector<16x128xf32>
    %c0_3 = arith.constant 0 : index
    %c0_4 = arith.constant 0 : index
    %4 = vector.load %arg3[%c0_3, %c0_4] : memref<1x128xf32, #tpu.memory_space<vmem>>, vector<1x128xf32>
    %5 = vector.broadcast %4 : vector<1x128xf32> to vector<16x128xf32>
    %6 = arith.addf %3, %5 : vector<16x128xf32>
    %cst_5 = arith.constant 0.000000e+00 : f32
    %7 = vector.broadcast %cst_5 : f32 to vector<16x128xf32>
    %8 = arith.maximumf %6, %7 : vector<16x128xf32>
    %9 = vector.extract_strided_slice %2 {offsets = [0, 128], sizes = [16, 128], strides = [1, 1]} : vector<16x256xf32> to vector<16x128xf32>
    %10 = arith.addf %8, %9 : vector<16x128xf32>
    %c0_6 = arith.constant 0 : index
    %c0_7 = arith.constant 0 : index
    %11 = vector.load %arg4[%c0_6, %c0_7] : memref<1x128xf32, #tpu.memory_space<vmem>>, vector<1x128xf32>
    %12 = vector.broadcast %11 : vector<1x128xf32> to vector<16x128xf32>
    %13 = arith.addf %10, %12 : vector<16x128xf32>
    %cst_8 = arith.constant 0.000000e+00 : f32
    %14 = vector.broadcast %cst_8 : f32 to vector<16x128xf32>
    %15 = arith.maximumf %13, %14 : vector<16x128xf32>
    %c0_9 = arith.constant 0 : index
    %c0_10 = arith.constant 0 : index
    %16 = vector.load %arg5[%c0_9, %c0_10] : memref<16x128xf32, #tpu.memory_space<vmem>>, vector<16x128xf32>
    tpu.vector_store %arg5[%c0_9, %c0_10], %15 {strides = array<i32>} : memref<16x128xf32, #tpu.memory_space<vmem>>, vector<16x128xf32>,
    return
  }
  func.func @transform_0(%arg0: i32) -> (i32, i32) {
    %c0_i32 = arith.constant 0 : i32
    %c0_i32_0 = arith.constant 0 : i32
    return %arg0, %c0_i32 : i32, i32
  }
  func.func @transform_1(%arg0: i32) -> (i32, i32) {
    %c0_i32 = arith.constant 0 : i32
    %c0_i32_0 = arith.constant 0 : i32
    %c0_i32_1 = arith.constant 0 : i32
    return %c0_i32, %c0_i32_0 : i32, i32
  }
  func.func @transform_2(%arg0: i32) -> (i32, i32) {
    %c0_i32 = arith.constant 0 : i32
    %c0_i32_0 = arith.constant 0 : i32
    %c0_i32_1 = arith.constant 0 : i32
    return %c0_i32, %c0_i32_0 : i32, i32
  }
  func.func @transform_3(%arg0: i32) -> (i32, i32) {
    %c0_i32 = arith.constant 0 : i32
    %c0_i32_0 = arith.constant 0 : i32
    %c0_i32_1 = arith.constant 0 : i32
    return %c0_i32, %c0_i32_0 : i32, i32
  }
  func.func @transform_4(%arg0: i32) -> (i32, i32) {
    %c0_i32 = arith.constant 0 : i32
    %c0_i32_0 = arith.constant 0 : i32
    return %arg0, %c0_i32 : i32, i32
  }
}

</mosaic_0001>

<llo_original>
// kernel: residual_block_forward.1
$region0: #{residual_block_forward.1}
  #allocation0 [shape = 'u32[]', space=smem, size = 0x4, offset = 0x4, fixed_abs, tag = 'smem constant byte address 0x4 - core index']
  #allocation1 [shape = 'u32[144,128]{1,0:T(1,128)}', space=vmem, size = 0x12000, scoped, tag = 'internal scratch']
  %s0 = inlined_call_operand.vmem [shape: bf16[64,216], index: 0, kind: input, shape index: {}]
  %s1 = inlined_call_operand.vmem [shape: bf16[216,256], index: 1, kind: input, shape index: {}]
  %s2 = inlined_call_operand.vmem [shape: f32[1,128], index: 2, kind: input, shape index: {}]
  %s3 = inlined_call_operand.vmem [shape: f32[1,128], index: 3, kind: input, shape index: {}]
  %s4 = inlined_call_operand.vmem [shape: f32[64,128], index: 4, kind: output, shape index: {}]
  %s5 = sld [smem:[#allocation0]]
  $region49: #{residual_block_forward.1} parent=0
    _
  %s7 = ssub.s32 1, %s5
  %s8 = scalar_select 0, %s7, %s5
  loop: start=0, step=1, limit=6
  $region2: #{residual_block_forward.1} parent=0 // loop_pre_header
    _
  $region3: #{residual_block_forward.1} parent=0 // loop_header
    %s10 = sphi 0, %s14
    %p11 = scmp.ge.s32.totalorder %s10, 6
    %s20 = sphi 0, %s22
    %s23 = sphi 0, %s20
    %s24 = sphi 0, %s23
    %s40 = sphi 0, %s24
    %s44 = sphi 0, %s44
    %s46 = sphi 0, %s44
    %s47 = sphi 0, %s46
    %s61 = sphi 0, %s47
    %s65 = sphi 0, %s65
    %s67 = sphi 0, %s65
    %s68 = sphi 0, %s67
    %s82 = sphi 0, %s68
    %s86 = sphi 0, %s86
    %s88 = sphi 0, %s86
    %s89 = sphi 0, %s88
    %s103 = sphi 0, %s89
    %s109 = sphi 0, %s111
    %s112 = sphi 0, %s109
    %s113 = sphi 0, %s112
    %s129 = sphi 0, %s113
  $region4: #{residual_block_forward.1} parent=0 // loop_header_branch
    %13 = sbr.rel (%p11) target = $region8
  $region5: #{residual_block_forward.1} parent=0 // loop_body
    %s15 = ssub.s32 %s10, 1
    %s16 = ssub.s32 %s10, 2
    %s17 = sadd.s32 %s10, 1
    %s18 = ssub.s32 %s10, %s17
    %p19 = scmp.eq.s32.totalorder %s18, 0
    %s21 = sadd.s32 %s20, 1
    %s22 = scalar_select %p19, %s20, %s21
    %p25 = pneg %p19
    %p26 = scmp.eq.s32.totalorder %s10, 3
    %p27 = por %p25, %p26
    %p28 = scmp.ne.s32.totalorder %s20, %s23
    %p29 = scmp.eq.s32.totalorder %s10, 0
    %p30 = por %p28, %p29
    %p31 = scmp.ne.s32.totalorder %s20, %s23
    %p32 = scmp.eq.s32.totalorder %s15, 3
    %p33 = por %p31, %p32
    %p34 = scmp.ne.s32.totalorder %s23, %s24
    %p35 = scmp.eq.s32.totalorder %s15, 0
    %p36 = por %p34, %p35
    %p37 = scmp.ne.s32.totalorder %s23, %s24
    %p38 = scmp.eq.s32.totalorder %s16, 3
    %p39 = por %p37, %p38
    %p41 = scmp.ne.s32.totalorder %s24, %s40
    %p42 = scmp.eq.s32.totalorder %s16, 0
    %p43 = por %p41, %p42
    %s45 = sadd.s32 %s44, 1
    %p48 = scmp.eq.s32.totalorder %s10, 3
    %p49 = scmp.ne.s32.totalorder %s44, %s46
    %p50 = scmp.eq.s32.totalorder %s10, 0
    %p51 = por %p49, %p50
    %p52 = scmp.ne.s32.totalorder %s44, %s46
    %p53 = scmp.eq.s32.totalorder %s15, 3
    %p54 = por %p52, %p53
    %p55 = scmp.ne.s32.totalorder %s46, %s47
    %p56 = scmp.eq.s32.totalorder %s15, 0
    %p57 = por %p55, %p56
    %p58 = scmp.ne.s32.totalorder %s46, %s47
    %p59 = scmp.eq.s32.totalorder %s16, 3
    %p60 = por %p58, %p59
    %p62 = scmp.ne.s32.totalorder %s47, %s61
    %p63 = scmp.eq.s32.totalorder %s16, 0
    %p64 = por %p62, %p63
    %s66 = sadd.s32 %s65, 1
    %p69 = scmp.eq.s32.totalorder %s10, 3
    %p70 = scmp.ne.s32.totalorder %s65, %s67
    %p71 = scmp.eq.s32.totalorder %s10, 0
    %p72 = por %p70, %p71
    %p73 = scmp.ne.s32.totalorder %s65, %s67
    %p74 = scmp.eq.s32.totalorder %s15, 3
    %p75 = por %p73, %p74
    %p76 = scmp.ne.s32.totalorder %s67, %s68
    %p77 = scmp.eq.s32.totalorder %s15, 0
    %p78 = por %p76, %p77
    %p79 = scmp.ne.s32.totalorder %s67, %s68
    %p80 = scmp.eq.s32.totalorder %s16, 3
    %p81 = por %p79, %p80
    %p83 = scmp.ne.s32.totalorder %s68, %s82
    %p84 = scmp.eq.s32.totalorder %s16, 0
    %p85 = por %p83, %p84
    %s87 = sadd.s32 %s86, 1
    %p90 = scmp.eq.s32.totalorder %s10, 3
    %p91 = scmp.ne.s32.totalorder %s86, %s88
    %p92 = scmp.eq.s32.totalorder %s10, 0
    %p93 = por %p91, %p92
    %p94 = scmp.ne.s32.totalorder %s86, %s88
    %p95 = scmp.eq.s32.totalorder %s15, 3
    %p96 = por %p94, %p95
    %p97 = scmp.ne.s32.totalorder %s88, %s89
    %p98 = scmp.eq.s32.totalorder %s15, 0
    %p99 = por %p97, %p98
    %p100 = scmp.ne.s32.totalorder %s88, %s89
    %p101 = scmp.eq.s32.totalorder %s16, 3
    %p102 = por %p100, %p101
    %p104 = scmp.ne.s32.totalorder %s89, %s103
    %p105 = scmp.eq.s32.totalorder %s16, 0
    %p106 = por %p104, %p105
    %s107 = ssub.s32 %s10, %s17
    %p108 = scmp.eq.s32.totalorder %s107, 0
    %s110 = sadd.s32 %s109, 1
    %s111 = scalar_select %p108, %s109, %s110
    %p114 = pneg %p108
    %p115 = scmp.eq.s32.totalorder %s10, 3
    %p116 = por %p114, %p115
    %p117 = scmp.ne.s32.totalorder %s109, %s112
    %p118 = scmp.eq.s32.totalorder %s10, 0
    %p119 = por %p117, %p118
    %p120 = scmp.ne.s32.totalorder %s109, %s112
    %p121 = scmp.eq.s32.totalorder %s15, 3
    %p122 = por %p120, %p121
    %p123 = scmp.ne.s32.totalorder %s112, %s113
    %p124 = scmp.eq.s32.totalorder %s15, 0
    %p125 = por %p123, %p124
    %p126 = scmp.ne.s32.totalorder %s112, %s113
    %p127 = scmp.eq.s32.totalorder %s16, 3
    %p128 = por %p126, %p127
    %p130 = scmp.ne.s32.totalorder %s113, %s129
    %p131 = scmp.eq.s32.totalorder %s16, 0
    %p132 = por %p130, %p131
    %p133 = scmp.le.s32.totalorder 1, %s10
    %p134 = scmp.lt.s32.totalorder %s10, 5
    %p135 = pnand %p133, %p134
    %p136 = pneg %p135
    // Predicated region
    $region9: #{residual_block_forward.1} parent=5 // pred_check
      _
    $region10: #{residual_block_forward.1} parent=5 // pred_check_branch
      %138 = sbr.rel (%p135) target = $region12
    $region11: #{residual_block_forward.1} parent=5 // pred_region
      %s139 = ssub.s32 %s10, 1
      // Predicated region
      $region13: #{residual_block_forward.1} parent=11 // pred_check
        %p140 = pneg %p57
      $region14: #{residual_block_forward.1} parent=11 // pred_check_branch
        %142 = sbr.rel (%p140) target = $region16
      $region15: #{residual_block_forward.1} parent=11 // pred_region
        _
      $region16: #{residual_block_forward.1} parent=11 // pred_fallthru
        _
      // Predicated region
      $region17: #{residual_block_forward.1} parent=11 // pred_check
        %p143 = pneg %p78
      $region18: #{residual_block_forward.1} parent=11 // pred_check_branch
        %145 = sbr.rel (%p143) target = $region20
      $region19: #{residual_block_forward.1} parent=11 // pred_region
        _
      $region20: #{residual_block_forward.1} parent=11 // pred_fallthru
        _
      // Predicated region
      $region21: #{residual_block_forward.1} parent=11 // pred_check
        %p146 = pneg %p99
      $region22: #{residual_block_forward.1} parent=11 // pred_check_branch
        %148 = sbr.rel (%p146) target = $region24
      $region23: #{residual_block_forward.1} parent=11 // pred_region
        _
      $region24: #{residual_block_forward.1} parent=11 // pred_fallthru
        _
    $region12: #{residual_block_forward.1} parent=5 // pred_fallthru
      _
    %p149 = scmp.lt.s32.totalorder %s10, 4
    // Predicated region
    $region25: #{residual_block_forward.1} parent=5 // pred_check
      %p150 = pneg %p149
    $region26: #{residual_block_forward.1} parent=5 // pred_check_branch
      %152 = sbr.rel (%p150) target = $region28
    $region27: #{residual_block_forward.1} parent=5 // pred_region
      // Predicated region
      $region29: #{residual_block_forward.1} parent=27 // pred_check
        %p153 = pneg %p30
      $region30: #{residual_block_forward.1} parent=27 // pred_check_branch
        %155 = sbr.rel (%p153) target = $region32
      $region31: #{residual_block_forward.1} parent=27 // pred_region
        %s156 = smul.u32 2, %s10
        %p157 = scmp.lt.s32.totalorder %s156, 7
        %s158 = scalar_select %p157, %s156, 7
        %s159 = smul.addr %s158, 2
        %s160 = smul.addr %s159, 4
        %s161 = scalar_lea.vmem %s0, %s160
        %s162 = smul.u32 2, %s10
      $region32: #{residual_block_forward.1} parent=27 // pred_fallthru
        _
    $region28: #{residual_block_forward.1} parent=5 // pred_fallthru
      _
    %p163 = scmp.le.s32.totalorder 1, %s10
    %p164 = scmp.lt.s32.totalorder %s10, 5
    %p165 = pnand %p163, %p164
    %p166 = pneg %p165
    // Predicated region
    $region33: #{residual_block_forward.1} parent=5 // pred_check
      _
    $region34: #{residual_block_forward.1} parent=5 // pred_check_branch
      %168 = sbr.rel (%p165) target = $region36
    $region35: #{residual_block_forward.1} parent=5 // pred_region
      %s169 = ssub.s32 %s10, 1
      %s170 = smul.u32 2, %s15
      %p171 = scmp.lt.s32.totalorder %s170, 7
      %s172 = scalar_select %p171, %s170, 7
      %s173 = smul.addr %s172, 2
      %s174 = smul.addr %s173, 4
      %s175 = scalar_lea.vmem %s0, %s174
      %p176 = pneg %p36
      %p177 = pneg %p33
      %p178 = pneg %p57
      %p179 = pneg %p54
      %p180 = pneg %p78
      %p181 = pneg %p75
      %p182 = pneg %p99
      %p183 = pneg %p96
      %p184 = pneg %p125
      %p185 = pneg %p122
      %s186 = smul.u32 2, %s15
      %p187 = scmp.lt.s32.totalorder %s186, 7
      %s188 = scalar_select %p187, %s186, 7
      %s189 = smul.addr %s188, 8
      %s190 = scalar_lea.vmem %s4, %s189
      %s191 = smul.u32 2, %s15
      %p192 = scmp.lt.s32.totalorder %s191, 7
      %s193 = scalar_select %p192, %s191, 7
      %s194 = smul.addr %s193, 2
      %s195 = smul.addr %s194, 4
      %s196 = scalar_lea.vmem %s0, %s195
      %s197 = smul.u32 2, %s15
      %s198 = smul.u32 2, %s15
      %p199 = scmp.lt.s32.totalorder %s198, 7
      %s200 = scalar_select %p199, %s198, 7
      %s201 = smul.addr %s200, 8
      %s202 = scalar_lea.vmem %s4, %s201
      %s203 = smul.u32 2, %s15
      %v205 = vld [vmem:[%s196] sm:$0xff]
      %v206 = vld [vmem:[%s196 + $0x8] sm:$0xff]
      %v207 = vld [vmem:[%s1] sm:$0xff]
      %v208 = vld [vmem:[%s1 + $0x8] sm:$0xff]
      %v209 = vld [vmem:[%s1 + $0x10] sm:$0xff]
      %v210 = vld [vmem:[%s1 + $0x18] sm:$0xff]
      %v211 = vld [vmem:[%s1 + $0x20] sm:$0xff]
      %v212 = vld [vmem:[%s1 + $0x28] sm:$0xff]
      %v213 = vld [vmem:[%s1 + $0x30] sm:$0xff]
      %v214 = vld [vmem:[%s1 + $0x38] sm:$0xff]
      %v215 = vld [vmem:[%s1 + $0x40] sm:$0xff]
      %v216 = vld [vmem:[%s1 + $0x48] sm:$0xff]
      %v217 = vld [vmem:[%s1 + $0x50] sm:$0xff]
      %v218 = vld [vmem:[%s1 + $0x58] sm:$0xff]
      %v219 = vld [vmem:[%s1 + $0x60] sm:$0xff]
      %v220 = vld [vmem:[%s1 + $0x68] sm:$0xff]
      %v221 = vld [vmem:[%s1 + $0x70] sm:$0xff]
      %v222 = vld [vmem:[%s1 + $0x78] sm:$0xff]
      %v223 = vld [vmem:[%s1 + $0x80] sm:$0xff]
      %v224 = vld [vmem:[%s1 + $0x88] sm:$0xff]
      %v225 = vld [vmem:[%s1 + $0x90] sm:$0xff]
      %v226 = vld [vmem:[%s1 + $0x98] sm:$0xff]
      %v227 = vld [vmem:[%s1 + $0xa0] sm:$0xff]
      %v228 = vld [vmem:[%s1 + $0xa8] sm:$0xff]
      %v229 = vld [vmem:[%s1 + $0xb0] sm:$0xff]
      %v230 = vld [vmem:[%s1 + $0xb8] sm:$0xff]
      %v231 = vld [vmem:[%s1 + $0xc0] sm:$0xff]
      %v232 = vld [vmem:[%s1 + $0xc8] sm:$0xff]
      %v233 = vld [vmem:[%s1 + $0xd0] sm:$0xff]
      %v236 = vunpack.c.l.b16 %v205
      %v237 = vunpack.c.h.b16 %v205
      %v238 = vunpack.c.l.b16 %v206
      %v239 = vunpack.c.h.b16 %v206
      %v240 = vpack.c.b16 %v238, %v236
      %v241 = vpack.c.b16 %v239, %v237
      %v270 = vunpack.c.l.b16 %v207
      %v271 = vunpack.c.h.b16 %v207
      %v272 = vunpack.c.l.b16 %v208
      %v273 = vunpack.c.h.b16 %v208
      %v274 = vunpack.c.l.b16 %v209
      %v275 = vunpack.c.h.b16 %v209
      %v276 = vunpack.c.l.b16 %v210
      %v277 = vunpack.c.h.b16 %v210
      %v278 = vunpack.c.l.b16 %v211
      %v279 = vunpack.c.h.b16 %v211
      %v280 = vunpack.c.l.b16 %v212
      %v281 = vunpack.c.h.b16 %v212
      %v282 = vunpack.c.l.b16 %v213
      %v283 = vunpack.c.h.b16 %v213
      %v284 = vunpack.c.l.b16 %v214
      %v285 = vunpack.c.h.b16 %v214
      %v286 = vunpack.c.l.b16 %v215
      %v287 = vunpack.c.h.b16 %v215
      %v288 = vunpack.c.l.b16 %v216
      %v289 = vunpack.c.h.b16 %v216
      %v290 = vunpack.c.l.b16 %v217
      %v291 = vunpack.c.h.b16 %v217
      %v292 = vunpack.c.l.b16 %v218
      %v293 = vunpack.c.h.b16 %v218
      %v294 = vunpack.c.l.b16 %v219
      %v295 = vunpack.c.h.b16 %v219
      %v296 = vunpack.c.l.b16 %v220
      %v297 = vunpack.c.h.b16 %v220
      %v298 = vunpack.c.l.b16 %v221
      %v299 = vunpack.c.h.b16 %v221
      %v300 = vunpack.c.l.b16 %v222
      %v301 = vunpack.c.h.b16 %v222
      %v302 = vunpack.c.l.b16 %v223
      %v303 = vunpack.c.h.b16 %v223
      %v304 = vunpack.c.l.b16 %v224
      %v305 = vunpack.c.h.b16 %v224
      %v306 = vunpack.c.l.b16 %v225
      %v307 = vunpack.c.h.b16 %v225
      %v308 = vunpack.c.l.b16 %v226
      %v309 = vunpack.c.h.b16 %v226
      %v310 = vunpack.c.l.b16 %v227
      %v311 = vunpack.c.h.b16 %v227
      %v312 = vunpack.c.l.b16 %v228
      %v313 = vunpack.c.h.b16 %v228
      %v314 = vunpack.c.l.b16 %v229
      %v315 = vunpack.c.h.b16 %v229
      %v316 = vunpack.c.l.b16 %v230
      %v317 = vunpack.c.h.b16 %v230
      %v318 = vunpack.c.l.b16 %v231
      %v319 = vunpack.c.h.b16 %v231
      %v320 = vunpack.c.l.b16 %v232
      %v321 = vunpack.c.h.b16 %v232
      %v322 = vunpack.c.l.b16 %v233
      %v323 = vunpack.c.h.b16 %v233
      %v324 = vpack.c.b16 %v272, %v270
      %v325 = vpack.c.b16 %v273, %v271
      %v326 = vpack.c.b16 %v276, %v274
      %v327 = vpack.c.b16 %v277, %v275
      %v328 = vpack.c.b16 %v280, %v278
      %v329 = vpack.c.b16 %v281, %v279
      %v330 = vpack.c.b16 %v284, %v282
      %v331 = vpack.c.b16 %v285, %v283
      %v332 = vpack.c.b16 %v288, %v286
      %v333 = vpack.c.b16 %v289, %v287
      %v334 = vpack.c.b16 %v292, %v290
      %v335 = vpack.c.b16 %v293, %v291
      %v336 = vpack.c.b16 %v296, %v294
      %v337 = vpack.c.b16 %v297, %v295
      %v338 = vpack.c.b16 %v300, %v298
      %v339 = vpack.c.b16 %v301, %v299
      %v340 = vpack.c.b16 %v304, %v302
      %v341 = vpack.c.b16 %v305, %v303
      %v342 = vpack.c.b16 %v308, %v306
      %v343 = vpack.c.b16 %v309, %v307
      %v344 = vpack.c.b16 %v312, %v310
      %v345 = vpack.c.b16 %v313, %v311
      %v346 = vpack.c.b16 %v316, %v314
      %v347 = vpack.c.b16 %v317, %v315
      %v348 = vpack.c.b16 %v320, %v318
      %v349 = vpack.c.b16 %v321, %v319
      %v350 = vpack.c.b16 %v322, %v322
      %v351 = vpack.c.b16 %v323, %v323
      %vm378 = vcmask 719872
      %v380 = vsel %vm378, %v241, 0
      %vm382 = vcmask 1043456
      %v384 = vsel %vm382, %v350, 0
      %v387 = vsel %vm382, %v351, 0
      %389 = vmatprep.subr.bf16.mxu0 %v325
      %390 = vmatpush1.bf16.msra.mxu0 %v324
      %391 = vmatprep.subr.bf16.mxu0 %v327
      %392 = vmatpush1.bf16.msra.mxu0 %v326
      %393 = vmatprep.subr.bf16.mxu0 %v329
      %394 = vmatpush1.bf16.msra.mxu0 %v328
      %395 = vmatprep.subr.bf16.mxu0 %v331
      %396 = vmatpush1.bf16.msra.mxu0 %v330
      %397 = vmatprep.subr.bf16.mxu0 %v333
      %398 = vmatpush1.bf16.msra.mxu0 %v332
      %399 = vmatprep.subr.bf16.mxu0 %v335
      %400 = vmatpush1.bf16.msra.mxu0 %v334
      %401 = vmatprep.subr.bf16.mxu0 %v337
      %402 = vmatpush1.bf16.msra.mxu0 %v336
      %403 = vmatprep.subr.bf16.mxu0 %v339
      %404 = vmatpush1.bf16.msra.mxu0 %v338
      %405 = vmatprep.subr.bf16.mxu0 %v341
      %406 = vmatpush1.bf16.msra.mxu0 %v340
      %407 = vmatprep.subr.bf16.mxu0 %v343
      %408 = vmatpush1.bf16.msra.mxu0 %v342
      %409 = vmatprep.subr.bf16.mxu0 %v345
      %410 = vmatpush1.bf16.msra.mxu0 %v344
      %411 = vmatprep.subr.bf16.mxu0 %v347
      %412 = vmatpush1.bf16.msra.mxu0 %v346
      %413 = vmatprep.subr.bf16.mxu0 %v349
      %414 = vmatpush1.bf16.msra.mxu0 %v348
      %415 = vmatprep.subr.bf16.mxu0 %v387
      %416 = vmatpush1.bf16.msra.mxu0 %v384
      %417 = vmatprep.subr.bf16.mxu0 0
      %418 = vmatpush1.bf16.msra.mxu0 0
      %419 = vmatprep.subr.bf16.mxu0 0
      %420 = vmatpush1.bf16.msra.mxu0 0
      %421 = vmatprep.mubr.bf16.mxu0 %v380
      %422 = vmatmul.mubr.bf16.gmra.mrb[0].mxu0 %v240
      %v423 = vpop.f32.mrb[0].mxu0
      %v424 = vadd.f32 0.0, %v423
      %v425 = vpop.f32.mrb[0].mxu0
      %v426 = vadd.f32 0.0, %v425
      %v427 = vpop.f32.mrb[0].mxu0
      %v428 = vadd.f32 0.0, %v427
      %v429 = vpop.f32.mrb[0].mxu0
      %v430 = vadd.f32 0.0, %v429
      %431 = vdwg.mxu0
      %v432 = vld [vmem:[%s2] sm:$0x1]
      %v434 = vlaneseq
      %v435 = vshrl.u32 %v434, 7
      %v436 = vsub.s32 0, %v435
      %v437 = vrot.slane %v432, %v436
      %v439 = vadd.f32 %v424, %v437
      %v440 = vadd.f32 %v428, %v437
      %v441 = vmax.f32 %v439, 0.0
      %v442 = vmax.f32 %v440, 0.0
      %v443 = vadd.f32 %v441, %v426
      %v444 = vadd.f32 %v442, %v430
      %v445 = vld [vmem:[%s3] sm:$0x1]
      %v447 = vlaneseq
      %v448 = vshrl.u32 %v447, 7
      %v449 = vsub.s32 0, %v448
      %v450 = vrot.slane %v445, %v449
      %v452 = vadd.f32 %v443, %v450
      %v453 = vadd.f32 %v444, %v450
      %v454 = vmax.f32 %v452, 0.0
      %v455 = vmax.f32 %v453, 0.0
      %456 = vst [vmem:[%s202] sm:$0xff] %v454
      %457 = vst [vmem:[%s202 + $0x8] sm:$0xff] %v455
      %s458 = smul.u32 2, %s15
      %p459 = scmp.lt.s32.totalorder %s458, 7
      %s460 = scalar_select %p459, %s458, 7
      %s461 = smul.addr %s460, 8
      %s462 = scalar_lea.vmem %s4, %s461
      // Predicated region
      $region37: #{residual_block_forward.1} parent=35 // pred_check
        %p463 = pneg %p122
      $region38: #{residual_block_forward.1} parent=35 // pred_check_branch
        %465 = sbr.rel (%p463) target = $region40
      $region39: #{residual_block_forward.1} parent=35 // pred_region
        %s466 = smul.u32 2, %s15
      $region40: #{residual_block_forward.1} parent=35 // pred_fallthru
        _
    $region36: #{residual_block_forward.1} parent=5 // pred_fallthru
      _
    %p467 = scmp.le.s32.totalorder 2, %s10
    // Predicated region
    $region41: #{residual_block_forward.1} parent=5 // pred_check
      %p468 = pneg %p467
    $region42: #{residual_block_forward.1} parent=5 // pred_check_branch
      %470 = sbr.rel (%p468) target = $region44
    $region43: #{residual_block_forward.1} parent=5 // pred_region
      %s471 = ssub.s32 %s10, 2
      // Predicated region
      $region45: #{residual_block_forward.1} parent=43 // pred_check
        %p472 = pneg %p128
      $region46: #{residual_block_forward.1} parent=43 // pred_check_branch
        %474 = sbr.rel (%p472) target = $region48
      $region47: #{residual_block_forward.1} parent=43 // pred_region
        %s475 = smul.u32 2, %s16
        %p476 = scmp.lt.s32.totalorder %s475, 7
        %s477 = scalar_select %p476, %s475, 7
        %s478 = smul.addr %s477, 8
        %s479 = scalar_lea.vmem %s4, %s478
      $region48: #{residual_block_forward.1} parent=43 // pred_fallthru
        _
    $region44: #{residual_block_forward.1} parent=5 // pred_fallthru
      _
  $region6: #{residual_block_forward.1} parent=0 // loop_footer
    %s14 = sadd.s32 1, %s10
  $region7: #{residual_block_forward.1} parent=0 // loop_footer_branch
    %9 = sbr.rel target = $region3
  $region8: #{residual_block_forward.1} parent=0 // loop_exit
    _

</llo_original>
